<compile_context>
chip_gen: v7x
topology: tpu7x:2x2x1
jax: 0.10.0
libtpu: 0.0.40
codegen_flags: <defaults>
</compile_context>

<pallas_src>
import functools

import jax
import jax.numpy as jnp
from jax.experimental import pallas as pl
from jax.experimental.pallas import tpu as pltpu

MIN_DEPTH = 0.5
HIDDEN_DIM = 256          # transformer.d_model in the reference module
BACKBONE_CHANNELS = 8     # backbone.num_channels (stand-in)
NUM_DEC_LAYERS = 4


def _round_up(x, m):
    return (x + m - 1) // m * m


def _pick_tile_m(M):
    """Largest M-tile in {2048,1024,512,256} that still yields >=2 grid steps.

    Keeps the double-buffered footprint (2 x tm x (Cin + 2*Cout) elems) far below
    the scoped-VMEM default on all of v5e/v6e/v7x while giving the BlockSpec
    pipeline (and the second TensorCore on v7x) real work."""
    for t in (2048, 1024, 512, 256):
        if M >= 2 * t:
            return t
    return _round_up(M, 8)


# ----------------------- Pallas kernels -----------------------

def _conv1x1_kernel(x_ref, w_ref, b_ref, pos_ref, o_ref):
    # x_ref: (TM, Cin) bf16   w_ref: (Cin, Cout) bf16   b_ref: (1, Cout) f32
    # pos_ref: (TM, Cout) bf16   o_ref: (TM, Cout) bf16
    acc = jnp.dot(x_ref[...], w_ref[...], preferred_element_type=jnp.float32)
    acc = acc + b_ref[...] + pos_ref[...].astype(jnp.float32)   # fused `+ pos` epilogue
    o_ref[...] = acc.astype(o_ref.dtype)


def conv1x1_add_pos(x_nhwc, w, b, pos_nhwc):
    """nn.Conv2d(Cin, Cout, kernel_size=1) on NHWC, with `+ pos` fused in the epilogue."""
    B, H, W, Cin = x_nhwc.shape
    Cout = w.shape[0]
    M = B * H * W
    x = x_nhwc.reshape(M, Cin).astype(jnp.bfloat16)
    wm = w.reshape(Cout, Cin).T.astype(jnp.bfloat16)          # (Cin, Cout)
    bm = b.reshape(1, Cout).astype(jnp.float32)
    pos = pos_nhwc.reshape(M, Cout).astype(jnp.bfloat16)
    tm = _pick_tile_m(M)
    out = pl.pallas_call(
        _conv1x1_kernel,
        out_shape=jax.ShapeDtypeStruct((M, Cout), jnp.bfloat16),
        grid=(pl.cdiv(M, tm),),
        in_specs=[
            pl.BlockSpec((tm, Cin), lambda i: (i, 0)),
            pl.BlockSpec((Cin, Cout), lambda i: (0, 0)),
            pl.BlockSpec((1, Cout), lambda i: (0, 0)),
            pl.BlockSpec((tm, Cout), lambda i: (i, 0)),
        ],
        out_specs=pl.BlockSpec((tm, Cout), lambda i: (i, 0)),
        compiler_params=pltpu.CompilerParams(dimension_semantics=("parallel",)),
    )(x, wm, bm, pos)
    return out.reshape(B, H, W, Cout)


def _invdepth_kernel(x_ref, w_ref, b_ref, o_ref, xp_ref, *, min_depth):
    # x_ref : (H, W, C) bf16   one decoder layer, one batch element (NHWC, C on lanes)
    # w_ref : (9, C) f32       3x3 taps (row-major over (ky, kx)) of this layer's head
    # b_ref : (L,) f32         SMEM biases, indexed by the layer grid axis
    # o_ref : (H, W) f32
    # xp_ref: (H+2, W+2, C) f32 VMEM scratch holding the zero-halo'd tile
    l = pl.program_id(0)
    H, W = o_ref.shape
    C = x_ref.shape[-1]

    # Build the 1-pixel zero halo in VMEM (no padded copy of the tensor in HBM).
    zrow = jnp.zeros((1, W + 2, C), jnp.float32)
    zcol = jnp.zeros((H, 1, C), jnp.float32)
    xp_ref[0:1, :, :] = zrow
    xp_ref[H + 1:H + 2, :, :] = zrow
    xp_ref[1:H + 1, 0:1, :] = zcol
    xp_ref[1:H + 1, W + 1:W + 2, :] = zcol
    xp_ref[1:H + 1, 1:W + 1, :] = x_ref[...].astype(jnp.float32)

    w = w_ref[...].astype(jnp.float32)             # read once; index in-register per tap
    acc_c = jnp.zeros((H, W, C), jnp.float32)      # channel-space accumulator (VPU FMAs)
    for ky in range(3):                            # static 9-tap unroll
        for kx in range(3):
            wv = w[3 * ky + kx].reshape(1, 1, C)
            acc_c = acc_c + xp_ref[ky:ky + H, kx:kx + W, :] * wv
    conv = jnp.sum(acc_c, axis=-1) + b_ref[l]      # single cross-lane (XLU) reduce
    o_ref[...] = jax.nn.sigmoid(conv) * (1.0 / min_depth)


def invdepth_fused(x_lbhwc, ws, bs, min_depth=MIN_DEPTH):
    """Four InvDepth heads (ConstantPad2d(1) + Conv2d(C,1,k=3) + Sigmoid/min_depth)
    fused into one pallas_call over a (layer, batch) grid."""
    L, B, H, W, C = x_lbhwc.shape
    return pl.pallas_call(
        functools.partial(_invdepth_kernel, min_depth=min_depth),
        out_shape=jax.ShapeDtypeStruct((L, B, H, W), jnp.float32),
        grid=(L, B),
        in_specs=[
            pl.BlockSpec((None, None, H, W, C), lambda l, b: (l, b, 0, 0, 0)),
            pl.BlockSpec((None, 9, C), lambda l, b: (l, 0, 0)),
            pl.BlockSpec(memory_space=pltpu.MemorySpace.SMEM),
        ],
        out_specs=pl.BlockSpec((None, None, H, W), lambda l, b: (l, b, 0, 0)),
        scratch_shapes=[pltpu.VMEM((H + 2, W + 2, C), jnp.float32)],
        compiler_params=pltpu.CompilerParams(
            dimension_semantics=("parallel", "parallel")),
    )(x_lbhwc.astype(jnp.bfloat16), ws.astype(jnp.float32), bs.astype(jnp.float32))


# ----------------------- stand-ins for external modules (NHWC) -----------------------

def _position_embedding(B, H, W, dim):
    """Deterministic sinusoidal position embedding, (B, H, W, dim)."""
    ys = jnp.arange(H, dtype=jnp.float32)
    xs = jnp.arange(W, dtype=jnp.float32)
    nf = dim // 4
    freqs = jnp.exp(-4.0 * jnp.arange(nf, dtype=jnp.float32) / nf)
    py = jnp.broadcast_to(ys[:, None, None] * freqs[None, None, :], (H, W, nf))
    px = jnp.broadcast_to(xs[None, :, None] * freqs[None, None, :], (H, W, nf))
    pos = jnp.concatenate(
        [jnp.sin(py), jnp.cos(py), jnp.sin(px), jnp.cos(px)], axis=-1)   # (H, W, dim)
    return jnp.broadcast_to(pos[None], (B, H, W, dim)) * 0.1


def backbone_standin(samples_nhwc):
    # TODO(synk): the real DETR backbone (ResNet + frozen BN + joiner) is an external
    # module not given here; deterministic stand-in producing (features, mask, pos).
    B, H, W, C = samples_nhwc.shape
    reps = -(-BACKBONE_CHANNELS // C)
    feat = jnp.tile(samples_nhwc, (1, 1, 1, reps))[..., :BACKBONE_CHANNELS]
    mask = jnp.zeros((B, H, W), dtype=jnp.bool_)
    pos = _position_embedding(B, H, W, HIDDEN_DIM)
    return feat, mask, pos


def transformer_standin(src_pos, mask, query_embed):
    # TODO(synk): the real DETR transformer (multi-head attn encoder/decoder) is an
    # external module not given here; deterministic stand-in emitting per-decoder-layer
    # spatial maps (L, B, H, W, d_model).  `src_pos` is input_proj(src) + pos, with the
    # `+ pos` already fused into the Pallas 1x1-conv epilogue.
    del mask
    q_bias = jnp.mean(query_embed, axis=0).astype(src_pos.dtype)          # (256,)
    h = src_pos
    layers = []
    for l in range(NUM_DEC_LAYERS):
        h = jnp.tanh(h * (0.5 + 0.1 * l)) + q_bias
        layers.append(h)
    decoder_out = jnp.stack(layers, axis=0)                               # (L,B,H,W,256)
    encoder_out = src_pos
    return decoder_out, encoder_out


# ----------------------- parameters & forward -----------------------

def init_params(key):
    ks = jax.random.split(key, 12)
    p = {
        "query_embed": 0.02 * jax.random.normal(ks[0], (12 * 40, 256), jnp.float32),
        "input_proj_w": 0.05 * jax.random.normal(
            ks[1], (HIDDEN_DIM, BACKBONE_CHANNELS, 1, 1), jnp.float32),
        "input_proj_b": 0.01 * jax.random.normal(ks[2], (HIDDEN_DIM,), jnp.float32),
    }
    for idx, name in enumerate(["disp1", "disp2", "disp3", "disp4"]):
        p[f"{name}_w"] = 0.05 * jax.random.normal(
            ks[3 + 2 * idx], (1, 256, 3, 3), jnp.float32)
        p[f"{name}_b"] = 0.01 * jax.random.normal(ks[4 + 2 * idx], (1,), jnp.float32)
    return p


def detr_forward(params, samples, training=False):
    """DETR.forward: backbone -> input_proj+pos (Pallas) -> transformer -> fused 4x InvDepth (Pallas)."""
    # Single layout change at the model boundary: NCHW -> NHWC (channels on lanes).
    x_nhwc = jnp.transpose(samples, (0, 2, 3, 1))
    feat, mask, pos = backbone_standin(x_nhwc)
    src_pos = conv1x1_add_pos(feat, params["input_proj_w"], params["input_proj_b"], pos)
    decoder_out, _encoder_out = transformer_standin(src_pos, mask, params["query_embed"])

    # Heads applied to decoder_out[-4..-1]: stack weights in matching order.
    head_names = ("disp4", "disp3", "disp2", "disp1")
    C = decoder_out.shape[-1]
    ws = jnp.stack([
        jnp.transpose(params[f"{n}_w"][0], (1, 2, 0)).reshape(9, C) for n in head_names
    ]).astype(jnp.float32)                                                # (4, 9, C)
    bs = jnp.stack([params[f"{n}_b"][0] for n in head_names]).astype(jnp.float32)  # (4,)

    disps = invdepth_fused(decoder_out[-4:], ws, bs)                      # (4, B, H, W)
    disp4 = disps[0][:, None, :, :]
    disp3 = disps[1][:, None, :, :]
    disp2 = disps[2][:, None, :, :]
    disp1 = disps[3][:, None, :, :]
    if training:
        return [disp1, disp2, disp3, disp4]
    return disp1


if __name__ == "__main__":
    key = jax.random.PRNGKey(0)
    pkey, xkey = jax.random.split(key)
    params = init_params(pkey)
    samples = jax.random.normal(xkey, (2, 3, 16, 16), jnp.float32)  # NCHW images
    disp1 = detr_forward(params, samples, training=False)
    disp1 = jax.block_until_ready(disp1)
    assert disp1.shape == (2, 1, 16, 16), disp1.shape
    assert bool(jnp.all(jnp.isfinite(disp1)))
    # sigmoid(x)/0.5 must lie in (0, 2)
    assert bool(jnp.all(disp1 > 0.0)) and bool(jnp.all(disp1 < 2.0))
    print("KERNEL_OK")
</pallas_src>

<mosaic_0001>
module attributes {stable_mosaic.version = 11 : i64} {
  func.func @_conv1x1_kernel(%arg0: i32, %arg1: memref<256x8xbf16, #tpu.memory_space<vmem>>, %arg2: memref<8x256xbf16, #tpu.memory_space<vmem>>, %arg3: memref<1x256xf32, #tpu.memory_space<vmem>>, %arg4: memref<256x256xbf16, #tpu.memory_space<vmem>>, %arg5: memref<256x256xbf16, #tpu.memory_space<vmem>>) attributes {dimension_semantics = [#tpu.dimension_semantics<parallel>], iteration_bounds = array<i64: 2>, scalar_prefetch = 0 : i64, scratch_operands = 0 : i64, tpu.core_type = #tpu.core_type<tc>, window_params = [{transform_indices = @transform_0, window_bounds = array<i64: 256, 8>}, {pipeline_mode = #tpu.pipeline_mode<synchronous>, transform_indices = @transform_1, window_bounds = array<i64: 8, 256>}, {pipeline_mode = #tpu.pipeline_mode<synchronous>, transform_indices = @transform_2, window_bounds = array<i64: 1, 256>}, {transform_indices = @transform_3, window_bounds = array<i64: 256, 256>}, {transform_indices = @transform_4, window_bounds = array<i64: 256, 256>}]} {
    %c0 = arith.constant 0 : index
    %c0_0 = arith.constant 0 : index
    %0 = vector.load %arg1[%c0, %c0_0] : memref<256x8xbf16, #tpu.memory_space<vmem>>, vector<256x8xbf16>
    %c0_1 = arith.constant 0 : index
    %c0_2 = arith.constant 0 : index
    %1 = vector.load %arg2[%c0_1, %c0_2] : memref<8x256xbf16, #tpu.memory_space<vmem>>, vector<8x256xbf16>
    %cst = arith.constant dense<0.000000e+00> : vector<256x256xf32>
    %2 = tpu.matmul %0, %1, %cst {dimension_numbers = #tpu.dot_dimension_numbers<[1], [0], [0], [1], [0, 0, 1, 1], [], []>} : vector<256x8xbf16>, vector<8x256xbf16>, vector<256x256xf32> -> vector<256x256xf32>
    %c0_3 = arith.constant 0 : index
    %c0_4 = arith.constant 0 : index
    %3 = vector.load %arg3[%c0_3, %c0_4] : memref<1x256xf32, #tpu.memory_space<vmem>>, vector<1x256xf32>
    %4 = vector.broadcast %3 : vector<1x256xf32> to vector<256x256xf32>
    %5 = arith.addf %2, %4 : vector<256x256xf32>
    %c0_5 = arith.constant 0 : index
    %c0_6 = arith.constant 0 : index
    %6 = vector.load %arg4[%c0_5, %c0_6] : memref<256x256xbf16, #tpu.memory_space<vmem>>, vector<256x256xbf16>
    %7 = arith.extf %6 : vector<256x256xbf16> to vector<256x256xf32>
    %8 = arith.addf %5, %7 : vector<256x256xf32>
    %9 = arith.truncf %8 : vector<256x256xf32> to vector<256x256xbf16>
    %c0_7 = arith.constant 0 : index
    %c0_8 = arith.constant 0 : index
    %10 = vector.load %arg5[%c0_7, %c0_8] : memref<256x256xbf16, #tpu.memory_space<vmem>>, vector<256x256xbf16>
    tpu.vector_store %arg5[%c0_7, %c0_8], %9 {strides = array<i32>} : memref<256x256xbf16, #tpu.memory_space<vmem>>, vector<256x256xbf16>,
    return
  }
  func.func @transform_0(%arg0: i32) -> (i32, i32) {
    %c0_i32 = arith.constant 0 : i32
    %c0_i32_0 = arith.constant 0 : i32
    return %arg0, %c0_i32 : i32, i32
  }
  func.func @transform_1(%arg0: i32) -> (i32, i32) {
    %c0_i32 = arith.constant 0 : i32
    %c0_i32_0 = arith.constant 0 : i32
    %c0_i32_1 = arith.constant 0 : i32
    return %c0_i32, %c0_i32_0 : i32, i32
  }
  func.func @transform_2(%arg0: i32) -> (i32, i32) {
    %c0_i32 = arith.constant 0 : i32
    %c0_i32_0 = arith.constant 0 : i32
    %c0_i32_1 = arith.constant 0 : i32
    return %c0_i32, %c0_i32_0 : i32, i32
  }
  func.func @transform_3(%arg0: i32) -> (i32, i32) {
    %c0_i32 = arith.constant 0 : i32
    %c0_i32_0 = arith.constant 0 : i32
    return %arg0, %c0_i32 : i32, i32
  }
  func.func @transform_4(%arg0: i32) -> (i32, i32) {
    %c0_i32 = arith.constant 0 : i32
    %c0_i32_0 = arith.constant 0 : i32
    return %arg0, %c0_i32 : i32, i32
  }
}

</mosaic_0001>

<llo_original>
// kernel: tpu_custom_call.1
$region0: #{tpu_custom_call.1}
  #allocation0 [shape = 'u32[]', space=smem, size = 0x4, offset = 0x4, fixed_abs, tag = 'smem constant byte address 0x4 - core index']
  #allocation1 [shape = 'u32[144,128]{1,0:T(1,128)}', space=vmem, size = 0x12000, scoped, tag = 'internal scratch']
  %s0 = inlined_call_operand.vmem [shape: bf16[512,8], index: 0, kind: input, shape index: {}]
  %s1 = inlined_call_operand.vmem [shape: bf16[8,256], index: 1, kind: input, shape index: {}]
  %s2 = inlined_call_operand.vmem [shape: f32[1,256], index: 2, kind: input, shape index: {}]
  %s3 = inlined_call_operand.hbm [shape: bf16[512,256], index: 3, kind: input, shape index: {}]
  %s4 = inlined_call_operand.hbm [shape: bf16[512,256], index: 4, kind: output, shape index: {}]
  %s5 = sld [smem:[#allocation0]]
  $region53: #{tpu_custom_call.1} parent=0
    _
  %s7 = ssub.s32 1, %s5
  %s8 = scalar_select 0, %s7, %s5
  $region1: #{tpu_custom_call.1} parent=0
    #allocation2 [shape = 'u8[262144]{0}', space=vmem, size = 0x40000, scoped, tag = 'input window, operand 3']
    #allocation3 [shape = 's32[2]{0}', space=sflag, size = 0x8, scoped, tag = 'scoped memory for tpu_custom_call.1']
    #allocation4 [shape = 's32[2]{0}', space=sflag, size = 0x8, scoped, tag = 'scoped memory for tpu_custom_call.1']
    #allocation5 [shape = 'u8[262144]{0}', space=vmem, size = 0x40000, scoped, tag = 'output window, operand 0']
    %9 = vsyncpa [#allocation3], 0
    %s10 = scalar_lea.sflag [#allocation3], 1
    %11 = vsyncpa %s10, 0
    %12 = vsyncpa [#allocation4], 0
    %s13 = scalar_lea.sflag [#allocation4], 1
    %14 = vsyncpa %s13, 0
    loop: start=0, step=1, limit=4
    $region2: #{tpu_custom_call.1} parent=1 // loop_pre_header
      _
    $region3: #{tpu_custom_call.1} parent=1 // loop_header
      %s16 = sphi 0, %s20
      %p17 = scmp.ge.s32.totalorder %s16, 4
      %s26 = sphi 0, %s28
      %s29 = sphi 0, %s26
      %s30 = sphi 0, %s29
      %s46 = sphi 0, %s30
      %s50 = sphi 0, %s50
      %s52 = sphi 0, %s50
      %s53 = sphi 0, %s52
      %s67 = sphi 0, %s53
      %s71 = sphi 0, %s71
      %s73 = sphi 0, %s71
      %s74 = sphi 0, %s73
      %s88 = sphi 0, %s74
      %s94 = sphi 0, %s96
      %s97 = sphi 0, %s94
      %s98 = sphi 0, %s97
      %s114 = sphi 0, %s98
      %s120 = sphi 0, %s122
      %s123 = sphi 0, %s120
      %s124 = sphi 0, %s123
      %s140 = sphi 0, %s124
    $region4: #{tpu_custom_call.1} parent=1 // loop_header_branch
      %19 = sbr.rel (%p17) target = $region8
    $region5: #{tpu_custom_call.1} parent=1 // loop_body
      %s21 = ssub.s32 %s16, 1
      %s22 = ssub.s32 %s16, 2
      %s23 = sadd.s32 %s16, 1
      %s24 = ssub.s32 %s16, %s23
      %p25 = scmp.eq.s32.totalorder %s24, 0
      %s27 = sadd.s32 %s26, 1
      %s28 = scalar_select %p25, %s26, %s27
      %p31 = pneg %p25
      %p32 = scmp.eq.s32.totalorder %s16, 1
      %p33 = por %p31, %p32
      %p34 = scmp.ne.s32.totalorder %s26, %s29
      %p35 = scmp.eq.s32.totalorder %s16, 0
      %p36 = por %p34, %p35
      %p37 = scmp.ne.s32.totalorder %s26, %s29
      %p38 = scmp.eq.s32.totalorder %s21, 1
      %p39 = por %p37, %p38
      %p40 = scmp.ne.s32.totalorder %s29, %s30
      %p41 = scmp.eq.s32.totalorder %s21, 0
      %p42 = por %p40, %p41
      %p43 = scmp.ne.s32.totalorder %s29, %s30
      %p44 = scmp.eq.s32.totalorder %s22, 1
      %p45 = por %p43, %p44
      %p47 = scmp.ne.s32.totalorder %s30, %s46
      %p48 = scmp.eq.s32.totalorder %s22, 0
      %p49 = por %p47, %p48
      %s51 = sadd.s32 %s50, 1
      %p54 = scmp.eq.s32.totalorder %s16, 1
      %p55 = scmp.ne.s32.totalorder %s50, %s52
      %p56 = scmp.eq.s32.totalorder %s16, 0
      %p57 = por %p55, %p56
      %p58 = scmp.ne.s32.totalorder %s50, %s52
      %p59 = scmp.eq.s32.totalorder %s21, 1
      %p60 = por %p58, %p59
      %p61 = scmp.ne.s32.totalorder %s52, %s53
      %p62 = scmp.eq.s32.totalorder %s21, 0
      %p63 = por %p61, %p62
      %p64 = scmp.ne.s32.totalorder %s52, %s53
      %p65 = scmp.eq.s32.totalorder %s22, 1
      %p66 = por %p64, %p65
      %p68 = scmp.ne.s32.totalorder %s53, %s67
      %p69 = scmp.eq.s32.totalorder %s22, 0
      %p70 = por %p68, %p69
      %s72 = sadd.s32 %s71, 1
      %p75 = scmp.eq.s32.totalorder %s16, 1
      %p76 = scmp.ne.s32.totalorder %s71, %s73
      %p77 = scmp.eq.s32.totalorder %s16, 0
      %p78 = por %p76, %p77
      %p79 = scmp.ne.s32.totalorder %s71, %s73
      %p80 = scmp.eq.s32.totalorder %s21, 1
      %p81 = por %p79, %p80
      %p82 = scmp.ne.s32.totalorder %s73, %s74
      %p83 = scmp.eq.s32.totalorder %s21, 0
      %p84 = por %p82, %p83
      %p85 = scmp.ne.s32.totalorder %s73, %s74
      %p86 = scmp.eq.s32.totalorder %s22, 1
      %p87 = por %p85, %p86
      %p89 = scmp.ne.s32.totalorder %s74, %s88
      %p90 = scmp.eq.s32.totalorder %s22, 0
      %p91 = por %p89, %p90
      %s92 = ssub.s32 %s16, %s23
      %p93 = scmp.eq.s32.totalorder %s92, 0
      %s95 = sadd.s32 %s94, 1
      %s96 = scalar_select %p93, %s94, %s95
      %p99 = pneg %p93
      %p100 = scmp.eq.s32.totalorder %s16, 1
      %p101 = por %p99, %p100
      %p102 = scmp.ne.s32.totalorder %s94, %s97
      %p103 = scmp.eq.s32.totalorder %s16, 0
      %p104 = por %p102, %p103
      %p105 = scmp.ne.s32.totalorder %s94, %s97
      %p106 = scmp.eq.s32.totalorder %s21, 1
      %p107 = por %p105, %p106
      %p108 = scmp.ne.s32.totalorder %s97, %s98
      %p109 = scmp.eq.s32.totalorder %s21, 0
      %p110 = por %p108, %p109
      %p111 = scmp.ne.s32.totalorder %s97, %s98
      %p112 = scmp.eq.s32.totalorder %s22, 1
      %p113 = por %p111, %p112
      %p115 = scmp.ne.s32.totalorder %s98, %s114
      %p116 = scmp.eq.s32.totalorder %s22, 0
      %p117 = por %p115, %p116
      %s118 = ssub.s32 %s16, %s23
      %p119 = scmp.eq.s32.totalorder %s118, 0
      %s121 = sadd.s32 %s120, 1
      %s122 = scalar_select %p119, %s120, %s121
      %p125 = pneg %p119
      %p126 = scmp.eq.s32.totalorder %s16, 1
      %p127 = por %p125, %p126
      %p128 = scmp.ne.s32.totalorder %s120, %s123
      %p129 = scmp.eq.s32.totalorder %s16, 0
      %p130 = por %p128, %p129
      %p131 = scmp.ne.s32.totalorder %s120, %s123
      %p132 = scmp.eq.s32.totalorder %s21, 1
      %p133 = por %p131, %p132
      %p134 = scmp.ne.s32.totalorder %s123, %s124
      %p135 = scmp.eq.s32.totalorder %s21, 0
      %p136 = por %p134, %p135
      %p137 = scmp.ne.s32.totalorder %s123, %s124
      %p138 = scmp.eq.s32.totalorder %s22, 1
      %p139 = por %p137, %p138
      %p141 = scmp.ne.s32.totalorder %s124, %s140
      %p142 = scmp.eq.s32.totalorder %s22, 0
      %p143 = por %p141, %p142
      %p144 = scmp.le.s32.totalorder 1, %s16
      %p145 = scmp.lt.s32.totalorder %s16, 3
      %p146 = pnand %p144, %p145
      %p147 = pneg %p146
      // Predicated region
      $region9: #{tpu_custom_call.1} parent=5 // pred_check
        _
      $region10: #{tpu_custom_call.1} parent=5 // pred_check_branch
        %149 = sbr.rel (%p146) target = $region12
      $region11: #{tpu_custom_call.1} parent=5 // pred_region
        %s150 = ssub.s32 %s16, 1
        // Predicated region
        $region13: #{tpu_custom_call.1} parent=11 // pred_check
          %p151 = pneg %p63
        $region14: #{tpu_custom_call.1} parent=11 // pred_check_branch
          %153 = sbr.rel (%p151) target = $region16
        $region15: #{tpu_custom_call.1} parent=11 // pred_region
          _
        $region16: #{tpu_custom_call.1} parent=11 // pred_fallthru
          _
        // Predicated region
        $region17: #{tpu_custom_call.1} parent=11 // pred_check
          %p154 = pneg %p84
        $region18: #{tpu_custom_call.1} parent=11 // pred_check_branch
          %156 = sbr.rel (%p154) target = $region20
        $region19: #{tpu_custom_call.1} parent=11 // pred_region
          _
        $region20: #{tpu_custom_call.1} parent=11 // pred_fallthru
          _
      $region12: #{tpu_custom_call.1} parent=5 // pred_fallthru
        _
      %p157 = scmp.lt.s32.totalorder %s16, 2
      // Predicated region
      $region21: #{tpu_custom_call.1} parent=5 // pred_check
        %p158 = pneg %p157
      $region22: #{tpu_custom_call.1} parent=5 // pred_check_branch
        %160 = sbr.rel (%p158) target = $region24
      $region23: #{tpu_custom_call.1} parent=5 // pred_region
        // Predicated region
        $region25: #{tpu_custom_call.1} parent=23 // pred_check
          %p161 = pneg %p36
        $region26: #{tpu_custom_call.1} parent=23 // pred_check_branch
          %163 = sbr.rel (%p161) target = $region28
        $region27: #{tpu_custom_call.1} parent=23 // pred_region
          %s164 = smul.u32 32, %s16
          %p165 = scmp.lt.s32.totalorder %s164, 63
          %s166 = scalar_select %p165, %s164, 63
          %s167 = smul.addr %s166, 4
          %s168 = scalar_lea.vmem %s0, %s167
          %s169 = smul.u32 32, %s16
        $region28: #{tpu_custom_call.1} parent=23 // pred_fallthru
          _
        // Predicated region
        $region29: #{tpu_custom_call.1} parent=23 // pred_check
          %p170 = pneg %p104
        $region30: #{tpu_custom_call.1} parent=23 // pred_check_branch
          %172 = sbr.rel (%p170) target = $region32
        $region31: #{tpu_custom_call.1} parent=23 // pred_region
          %s173 = sand.u32 %s94, 1
          %s174 = scalar_lea.sflag [#allocation3], %s173
          %s175 = sand.u32 %s94, 1
          %s176 = smul.addr %s175, 256
          %s177 = scalar_lea.vmem [#allocation2], %s176
          %s178 = smul.u32 32, %s16
          %s180 = ssub.s32 4096, 4096
          %181 = vsyncadd %s174, %s180
          %s182 = smul.addr %s178, 2
          %s183 = smul.addr %s182, 64
          %s184 = scalar_lea.hbm %s3, %s183
          %s185 = sshll.u32 %s177, 4
          %s186 = int_to_ptr.vmem [resolvable:$true] %s185
          %191 = dma.hbm_to_vmem [thread:$0]  %s184, 4096, %s186, %s174, 128, 128, 8
        $region32: #{tpu_custom_call.1} parent=23 // pred_fallthru
          _
      $region24: #{tpu_custom_call.1} parent=5 // pred_fallthru
        _
      %p192 = scmp.le.s32.totalorder 1, %s16
      %p193 = scmp.lt.s32.totalorder %s16, 3
      %p194 = pnand %p192, %p193
      %p195 = pneg %p194
      // Predicated region
      $region33: #{tpu_custom_call.1} parent=5 // pred_check
        _
      $region34: #{tpu_custom_call.1} parent=5 // pred_check_branch
        %197 = sbr.rel (%p194) target = $region36
      $region35: #{tpu_custom_call.1} parent=5 // pred_region
        %s198 = ssub.s32 %s16, 1
        %s199 = sand.u32 %s97, 1
        %s200 = scalar_lea.sflag [#allocation3], %s199
        %s201 = sand.u32 %s97, 1
        %s202 = smul.addr %s201, 256
        %s203 = scalar_lea.vmem [#allocation2], %s202
        // Predicated region
        $region37: #{tpu_custom_call.1} parent=35 // pred_check
          %p204 = pneg %p110
        $region38: #{tpu_custom_call.1} parent=35 // pred_check_branch
          %206 = sbr.rel (%p204) target = $region40
        $region39: #{tpu_custom_call.1} parent=35 // pred_region
          %207 = dma.done %s200, 4096
        $region40: #{tpu_custom_call.1} parent=35 // pred_fallthru
          _
        %s208 = smul.u32 32, %s21
        %p209 = scmp.lt.s32.totalorder %s208, 63
        %s210 = scalar_select %p209, %s208, 63
        %s211 = smul.addr %s210, 4
        %s212 = scalar_lea.vmem %s0, %s211
        %p213 = pneg %p42
        %p214 = pneg %p39
        %p215 = pneg %p63
        %p216 = pneg %p60
        %p217 = pneg %p84
        %p218 = pneg %p81
        %s219 = sand.u32 %s97, 1
        %s220 = scalar_lea.sflag [#allocation3], %s219
        %s221 = sand.u32 %s97, 1
        %s222 = smul.addr %s221, 256
        %s223 = scalar_lea.vmem [#allocation2], %s222
        %p224 = pneg %p110
        %p225 = pneg %p107
        %p226 = pneg %p136
        %p227 = pneg %p133
        %s228 = sand.u32 %s123, 1
        %s229 = scalar_lea.sflag [#allocation4], %s228
        %s230 = sand.u32 %s123, 1
        %s231 = smul.addr %s230, 256
        %s232 = scalar_lea.vmem [#allocation5], %s231
        %s233 = smul.u32 32, %s21
        %p234 = scmp.lt.s32.totalorder %s233, 63
        %s235 = scalar_select %p234, %s233, 63
        %s236 = smul.addr %s235, 4
        %s237 = scalar_lea.vmem %s0, %s236
        %s238 = smul.u32 32, %s21
        %s239 = smul.u32 32, %s21
        %s240 = smul.u32 32, %s21
        %v242 = vld [vmem:[%s237] sm:$0xf]
        %v243 = vld [vmem:[%s237 + $0x4] sm:$0xf]
        %v244 = vld [vmem:[%s237 + $0x8] sm:$0xf]
        %v245 = vld [vmem:[%s237 + $0xc] sm:$0xf]
        %v246 = vld [vmem:[%s237 + $0x10] sm:$0xf]
        %v247 = vld [vmem:[%s237 + $0x14] sm:$0xf]
        %v248 = vld [vmem:[%s237 + $0x18] sm:$0xf]
        %v249 = vld [vmem:[%s237 + $0x1c] sm:$0xf]
        %v250 = vld [vmem:[%s237 + $0x20] sm:$0xf]
        %v251 = vld [vmem:[%s237 + $0x24] sm:$0xf]
        %v252 = vld [vmem:[%s237 + $0x28] sm:$0xf]
        %v253 = vld [vmem:[%s237 + $0x2c] sm:$0xf]
        %v254 = vld [vmem:[%s237 + $0x30] sm:$0xf]
        %v255 = vld [vmem:[%s237 + $0x34] sm:$0xf]
        %v256 = vld [vmem:[%s237 + $0x38] sm:$0xf]
        %v257 = vld [vmem:[%s237 + $0x3c] sm:$0xf]
        %v258 = vld [vmem:[%s237 + $0x40] sm:$0xf]
        %v259 = vld [vmem:[%s237 + $0x44] sm:$0xf]
        %v260 = vld [vmem:[%s237 + $0x48] sm:$0xf]
        %v261 = vld [vmem:[%s237 + $0x4c] sm:$0xf]
        %v262 = vld [vmem:[%s237 + $0x50] sm:$0xf]
        %v263 = vld [vmem:[%s237 + $0x54] sm:$0xf]
        %v264 = vld [vmem:[%s237 + $0x58] sm:$0xf]
        %v265 = vld [vmem:[%s237 + $0x5c] sm:$0xf]
        %v266 = vld [vmem:[%s237 + $0x60] sm:$0xf]
        %v267 = vld [vmem:[%s237 + $0x64] sm:$0xf]
        %v268 = vld [vmem:[%s237 + $0x68] sm:$0xf]
        %v269 = vld [vmem:[%s237 + $0x6c] sm:$0xf]
        %v270 = vld [vmem:[%s237 + $0x70] sm:$0xf]
        %v271 = vld [vmem:[%s237 + $0x74] sm:$0xf]
        %v272 = vld [vmem:[%s237 + $0x78] sm:$0xf]
        %v273 = vld [vmem:[%s237 + $0x7c] sm:$0xf]
        %v274 = vld [vmem:[%s1] sm:$0xff]
        %v275 = vld [vmem:[%s2] sm:$0x3]
        %v277 = vlaneseq
        %v278 = vshrl.u32 %v277, 7
        %v279 = vsub.s32 0, %v278
        %v280 = vrot.slane %v275, %v279
        %v281 = vlaneseq
        %v282 = vshrl.u32 %v281, 7
        %v283 = vsub.s32 1, %v282
        %v284 = vrot.slane %v275, %v283
        %v319 = vunpack.c.l.b16 %v242
        %v320 = vunpack.c.l.b16 %v243
        %v321 = vunpack.c.l.b16 %v244
        %v322 = vunpack.c.l.b16 %v245
        %v323 = vunpack.c.l.b16 %v246
        %v324 = vunpack.c.l.b16 %v247
        %v325 = vunpack.c.l.b16 %v248
        %v326 = vunpack.c.l.b16 %v249
        %v327 = vunpack.c.l.b16 %v250
        %v328 = vunpack.c.l.b16 %v251
        %v329 = vunpack.c.l.b16 %v252
        %v330 = vunpack.c.l.b16 %v253
        %v331 = vunpack.c.l.b16 %v254
        %v332 = vunpack.c.l.b16 %v255
        %v333 = vunpack.c.l.b16 %v256
        %v334 = vunpack.c.l.b16 %v257
        %v335 = vunpack.c.l.b16 %v258
        %v336 = vunpack.c.l.b16 %v259
        %v337 = vunpack.c.l.b16 %v260
        %v338 = vunpack.c.l.b16 %v261
        %v339 = vunpack.c.l.b16 %v262
        %v340 = vunpack.c.l.b16 %v263
        %v341 = vunpack.c.l.b16 %v264
        %v342 = vunpack.c.l.b16 %v265
        %v343 = vunpack.c.l.b16 %v266
        %v344 = vunpack.c.l.b16 %v267
        %v345 = vunpack.c.l.b16 %v268
        %v346 = vunpack.c.l.b16 %v269
        %v347 = vunpack.c.l.b16 %v270
        %v348 = vunpack.c.l.b16 %v271
        %v349 = vunpack.c.l.b16 %v272
        %v350 = vunpack.c.l.b16 %v273
        %v351 = vpack.c.b16 %v320, %v319
        %v352 = vpack.c.b16 %v322, %v321
        %v353 = vpack.c.b16 %v324, %v323
        %v354 = vpack.c.b16 %v326, %v325
        %v355 = vpack.c.b16 %v328, %v327
        %v356 = vpack.c.b16 %v330, %v329
        %v357 = vpack.c.b16 %v332, %v331
        %v358 = vpack.c.b16 %v334, %v333
        %v359 = vpack.c.b16 %v336, %v335
        %v360 = vpack.c.b16 %v338, %v337
        %v361 = vpack.c.b16 %v340, %v339
        %v362 = vpack.c.b16 %v342, %v341
        %v363 = vpack.c.b16 %v344, %v343
        %v364 = vpack.c.b16 %v346, %v345
        %v365 = vpack.c.b16 %v348, %v347
        %v366 = vpack.c.b16 %v350, %v349
        %v368 = vunpack.c.l.b16 %v274
        %v369 = vunpack.c.h.b16 %v274
        %v370 = vpack.c.b16 %v368, %v368
        %v371 = vpack.c.b16 %v369, %v369
        %vm372 = vcmask 64512
        %v374 = vsel %vm372, %v351, 0
        %v377 = vsel %vm372, %v352, 0
        %v380 = vsel %vm372, %v353, 0
        %v383 = vsel %vm372, %v354, 0
        %v386 = vsel %vm372, %v355, 0
        %v389 = vsel %vm372, %v356, 0
        %v392 = vsel %vm372, %v357, 0
        %v395 = vsel %vm372, %v358, 0
        %v398 = vsel %vm372, %v359, 0
        %v401 = vsel %vm372, %v360, 0
        %v404 = vsel %vm372, %v361, 0
        %v407 = vsel %vm372, %v362, 0
        %v410 = vsel %vm372, %v363, 0
        %v413 = vsel %vm372, %v364, 0
        %v416 = vsel %vm372, %v365, 0
        %v419 = vsel %vm372, %v366, 0
        %vm421 = vcmask 1043456
        %v423 = vsel %vm421, %v370, 0
        %v426 = vsel %vm421, %v371, 0
        %428 = vmatprep.subr.bf16.mxu0 %v426
        %429 = vmatpush1.bf16.msra.mxu0 %v423
        %430 = vmatprep.subr.bf16.mxu0 0
        %431 = vmatpush1.bf16.msra.mxu0 0
        %432 = vmatprep.subr.bf16.mxu0 0
        %433 = vmatpush1.bf16.msra.mxu0 0
        %434 = vmatprep.subr.bf16.mxu0 0
        %435 = vmatpush1.bf16.msra.mxu0 0
        %436 = vmatprep.subr.bf16.mxu0 0
        %437 = vmatpush1.bf16.msra.mxu0 0
        %438 = vmatprep.subr.bf16.mxu0 0
        %439 = vmatpush1.bf16.msra.mxu0 0
        %440 = vmatprep.subr.bf16.mxu0 0
        %441 = vmatpush1.bf16.msra.mxu0 0
        %442 = vmatprep.subr.bf16.mxu0 0
        %443 = vmatpush1.bf16.msra.mxu0 0
        %444 = vmatprep.subr.bf16.mxu0 0
        %445 = vmatpush1.bf16.msra.mxu0 0
        %446 = vmatprep.subr.bf16.mxu0 0
        %447 = vmatpush1.bf16.msra.mxu0 0
        %448 = vmatprep.subr.bf16.mxu0 0
        %449 = vmatpush1.bf16.msra.mxu0 0
        %450 = vmatprep.subr.bf16.mxu0 0
        %451 = vmatpush1.bf16.msra.mxu0 0
        %452 = vmatprep.subr.bf16.mxu0 0
        %453 = vmatpush1.bf16.msra.mxu0 0
        %454 = vmatprep.subr.bf16.mxu0 0
        %455 = vmatpush1.bf16.msra.mxu0 0
        %456 = vmatprep.subr.bf16.mxu0 0
        %457 = vmatpush1.bf16.msra.mxu0 0
        %458 = vmatprep.subr.bf16.mxu0 0
        %459 = vmatpush1.bf16.msra.mxu0 0
        %460 = vmatprep.mubr.bf16.mxu0 0
        %461 = vmatmul.mubr.bf16.gmra.mrb[0].mxu0 %v374
        %v462 = vpop.f32.mrb[0].mxu0
        %v463 = vadd.f32 %v280, %v462
        %v464 = vpop.f32.mrb[0].mxu0
        %v465 = vadd.f32 %v284, %v464
        %v466 = vpop.f32.mrb[0].mxu0
        %v467 = vadd.f32 %v280, %v466
        %v468 = vpop.f32.mrb[0].mxu0
        %v469 = vadd.f32 %v284, %v468
        %470 = vmatprep.mubr.bf16.mxu0 0
        %471 = vmatmul.mubr.bf16.gmra.mrb[0].mxu0 %v377
        %v472 = vpop.f32.mrb[0].mxu0
        %v473 = vadd.f32 %v280, %v472
        %v474 = vpop.f32.mrb[0].mxu0
        %v475 = vadd.f32 %v284, %v474
        %v476 = vpop.f32.mrb[0].mxu0
        %v477 = vadd.f32 %v280, %v476
        %v478 = vpop.f32.mrb[0].mxu0
        %v479 = vadd.f32 %v284, %v478
        %480 = vmatprep.mubr.bf16.mxu0 0
        %481 = vmatmul.mubr.bf16.gmra.mrb[0].mxu0 %v380
        %v482 = vpop.f32.mrb[0].mxu0
        %v483 = vadd.f32 %v280, %v482
        %v484 = vpop.f32.mrb[0].mxu0
        %v485 = vadd.f32 %v284, %v484
        %v486 = vpop.f32.mrb[0].mxu0
        %v487 = vadd.f32 %v280, %v486
        %v488 = vpop.f32.mrb[0].mxu0
        %v489 = vadd.f32 %v284, %v488
        %490 = vmatprep.mubr.bf16.mxu0 0
        %491 = vmatmul.mubr.bf16.gmra.mrb[0].mxu0 %v383
        %v492 = vpop.f32.mrb[0].mxu0
        %v493 = vadd.f32 %v280, %v492
        %v494 = vpop.f32.mrb[0].mxu0
        %v495 = vadd.f32 %v284, %v494
        %v496 = vpop.f32.mrb[0].mxu0
        %v497 = vadd.f32 %v280, %v496
        %v498 = vpop.f32.mrb[0].mxu0
        %v499 = vadd.f32 %v284, %v498
        %500 = vmatprep.mubr.bf16.mxu0 0
        %501 = vmatmul.mubr.bf16.gmra.mrb[0].mxu0 %v386
        %v502 = vpop.f32.mrb[0].mxu0
        %v503 = vadd.f32 %v280, %v502
        %v504 = vpop.f32.mrb[0].mxu0
        %v505 = vadd.f32 %v284, %v504
        %v506 = vpop.f32.mrb[0].mxu0
        %v507 = vadd.f32 %v280, %v506
        %v508 = vpop.f32.mrb[0].mxu0
        %v509 = vadd.f32 %v284, %v508
        %510 = vmatprep.mubr.bf16.mxu0 0
        %511 = vmatmul.mubr.bf16.gmra.mrb[0].mxu0 %v389
        %v512 = vpop.f32.mrb[0].mxu0
        %v513 = vadd.f32 %v280, %v512
        %v514 = vpop.f32.mrb[0].mxu0
        %v515 = vadd.f32 %v284, %v514
        %v516 = vpop.f32.mrb[0].mxu0
        %v517 = vadd.f32 %v280, %v516
        %v518 = vpop.f32.mrb[0].mxu0
        %v519 = vadd.f32 %v284, %v518
        %520 = vmatprep.mubr.bf16.mxu0 0
        %521 = vmatmul.mubr.bf16.gmra.mrb[0].mxu0 %v392
        %v522 = vpop.f32.mrb[0].mxu0
        %v523 = vadd.f32 %v280, %v522
        %v524 = vpop.f32.mrb[0].mxu0
        %v525 = vadd.f32 %v284, %v524
        %v526 = vpop.f32.mrb[0].mxu0
        %v527 = vadd.f32 %v280, %v526
        %v528 = vpop.f32.mrb[0].mxu0
        %v529 = vadd.f32 %v284, %v528
        %530 = vmatprep.mubr.bf16.mxu0 0
        %531 = vmatmul.mubr.bf16.gmra.mrb[0].mxu0 %v395
        %v532 = vpop.f32.mrb[0].mxu0
        %v533 = vadd.f32 %v280, %v532
        %v534 = vpop.f32.mrb[0].mxu0
        %v535 = vadd.f32 %v284, %v534
        %v536 = vpop.f32.mrb[0].mxu0
        %v537 = vadd.f32 %v280, %v536
        %v538 = vpop.f32.mrb[0].mxu0
        %v539 = vadd.f32 %v284, %v538
        %540 = vmatprep.mubr.bf16.mxu0 0
        %541 = vmatmul.mubr.bf16.gmra.mrb[0].mxu0 %v398
        %v542 = vpop.f32.mrb[0].mxu0
        %v543 = vadd.f32 %v280, %v542
        %v544 = vpop.f32.mrb[0].mxu0
        %v545 = vadd.f32 %v284, %v544
        %v546 = vpop.f32.mrb[0].mxu0
        %v547 = vadd.f32 %v280, %v546
        %v548 = vpop.f32.mrb[0].mxu0
        %v549 = vadd.f32 %v284, %v548
        %550 = vmatprep.mubr.bf16.mxu0 0
        %551 = vmatmul.mubr.bf16.gmra.mrb[0].mxu0 %v401
        %v552 = vpop.f32.mrb[0].mxu0
        %v553 = vadd.f32 %v280, %v552
        %v554 = vpop.f32.mrb[0].mxu0
        %v555 = vadd.f32 %v284, %v554
        %v556 = vpop.f32.mrb[0].mxu0
        %v557 = vadd.f32 %v280, %v556
        %v558 = vpop.f32.mrb[0].mxu0
        %v559 = vadd.f32 %v284, %v558
        %560 = vmatprep.mubr.bf16.mxu0 0
        %561 = vmatmul.mubr.bf16.gmra.mrb[0].mxu0 %v404
        %v562 = vpop.f32.mrb[0].mxu0
        %v563 = vadd.f32 %v280, %v562
        %v564 = vpop.f32.mrb[0].mxu0
        %v565 = vadd.f32 %v284, %v564
        %v566 = vpop.f32.mrb[0].mxu0
        %v567 = vadd.f32 %v280, %v566
        %v568 = vpop.f32.mrb[0].mxu0
        %v569 = vadd.f32 %v284, %v568
        %570 = vmatprep.mubr.bf16.mxu0 0
        %571 = vmatmul.mubr.bf16.gmra.mrb[0].mxu0 %v407
        %v572 = vpop.f32.mrb[0].mxu0
        %v573 = vadd.f32 %v280, %v572
        %v574 = vpop.f32.mrb[0].mxu0
        %v575 = vadd.f32 %v284, %v574
        %v576 = vpop.f32.mrb[0].mxu0
        %v577 = vadd.f32 %v280, %v576
        %v578 = vpop.f32.mrb[0].mxu0
        %v579 = vadd.f32 %v284, %v578
        %580 = vmatprep.mubr.bf16.mxu0 0
        %581 = vmatmul.mubr.bf16.gmra.mrb[0].mxu0 %v410
        %v582 = vpop.f32.mrb[0].mxu0
        %v583 = vadd.f32 %v280, %v582
        %v584 = vpop.f32.mrb[0].mxu0
        %v585 = vadd.f32 %v284, %v584
        %v586 = vpop.f32.mrb[0].mxu0
        %v587 = vadd.f32 %v280, %v586
        %v588 = vpop.f32.mrb[0].mxu0
        %v589 = vadd.f32 %v284, %v588
        %590 = vmatprep.mubr.bf16.mxu0 0
        %591 = vmatmul.mubr.bf16.gmra.mrb[0].mxu0 %v413
        %v592 = vpop.f32.mrb[0].mxu0
        %v593 = vadd.f32 %v280, %v592
        %v594 = vpop.f32.mrb[0].mxu0
        %v595 = vadd.f32 %v284, %v594
        %v596 = vpop.f32.mrb[0].mxu0
        %v597 = vadd.f32 %v280, %v596
        %v598 = vpop.f32.mrb[0].mxu0
        %v599 = vadd.f32 %v284, %v598
        %600 = vmatprep.mubr.bf16.mxu0 0
        %601 = vmatmul.mubr.bf16.gmra.mrb[0].mxu0 %v416
        %v602 = vpop.f32.mrb[0].mxu0
        %v603 = vadd.f32 %v280, %v602
        %v604 = vpop.f32.mrb[0].mxu0
        %v605 = vadd.f32 %v284, %v604
        %v606 = vpop.f32.mrb[0].mxu0
        %v607 = vadd.f32 %v280, %v606
        %v608 = vpop.f32.mrb[0].mxu0
        %v609 = vadd.f32 %v284, %v608
        %610 = vmatprep.mubr.bf16.mxu0 0
        %611 = vmatmul.mubr.bf16.gmra.mrb[0].mxu0 %v419
        %v612 = vpop.f32.mrb[0].mxu0
        %v613 = vadd.f32 %v280, %v612
        %v614 = vpop.f32.mrb[0].mxu0
        %v615 = vadd.f32 %v284, %v614
        %v616 = vpop.f32.mrb[0].mxu0
        %v617 = vadd.f32 %v280, %v616
        %v618 = vpop.f32.mrb[0].mxu0
        %v619 = vadd.f32 %v284, %v618
        %620 = vdwg.mxu0
        %v621 = vld [vmem:[%s203] sm:$0xff]
        %v622 = vld [vmem:[%s203 + $0x8] sm:$0xff]
        %v623 = vld [vmem:[%s203 + $0x10] sm:$0xff]
        %v624 = vld [vmem:[%s203 + $0x18] sm:$0xff]
        %v625 = vld [vmem:[%s203 + $0x20] sm:$0xff]
        %v626 = vld [vmem:[%s203 + $0x28] sm:$0xff]
        %v627 = vld [vmem:[%s203 + $0x30] sm:$0xff]
        %v628 = vld [vmem:[%s203 + $0x38] sm:$0xff]
        %v629 = vld [vmem:[%s203 + $0x40] sm:$0xff]
        %v630 = vld [vmem:[%s203 + $0x48] sm:$0xff]
        %v631 = vld [vmem:[%s203 + $0x50] sm:$0xff]
        %v632 = vld [vmem:[%s203 + $0x58] sm:$0xff]
        %v633 = vld [vmem:[%s203 + $0x60] sm:$0xff]
        %v634 = vld [vmem:[%s203 + $0x68] sm:$0xff]
        %v635 = vld [vmem:[%s203 + $0x70] sm:$0xff]
        %v636 = vld [vmem:[%s203 + $0x78] sm:$0xff]
        %v637 = vld [vmem:[%s203 + $0x80] sm:$0xff]
        %v638 = vld [vmem:[%s203 + $0x88] sm:$0xff]
        %v639 = vld [vmem:[%s203 + $0x90] sm:$0xff]
        %v640 = vld [vmem:[%s203 + $0x98] sm:$0xff]
        %v641 = vld [vmem:[%s203 + $0xa0] sm:$0xff]
        %v642 = vld [vmem:[%s203 + $0xa8] sm:$0xff]
        %v643 = vld [vmem:[%s203 + $0xb0] sm:$0xff]
        %v644 = vld [vmem:[%s203 + $0xb8] sm:$0xff]
        %v645 = vld [vmem:[%s203 + $0xc0] sm:$0xff]
        %v646 = vld [vmem:[%s203 + $0xc8] sm:$0xff]
        %v647 = vld [vmem:[%s203 + $0xd0] sm:$0xff]
        %v648 = vld [vmem:[%s203 + $0xd8] sm:$0xff]
        %v649 = vld [vmem:[%s203 + $0xe0] sm:$0xff]
        %v650 = vld [vmem:[%s203 + $0xe8] sm:$0xff]
        %v651 = vld [vmem:[%s203 + $0xf0] sm:$0xff]
        %v652 = vld [vmem:[%s203 + $0xf8] sm:$0xff]
        %v653 = vunpack.c.l.bf16 %v621
        %v654 = vunpack.c.h.bf16 %v621
        %v655 = vunpack.c.l.bf16 %v622
        %v656 = vunpack.c.h.bf16 %v622
        %v657 = vunpack.c.l.bf16 %v623
        %v658 = vunpack.c.h.bf16 %v623
        %v659 = vunpack.c.l.bf16 %v624
        %v660 = vunpack.c.h.bf16 %v624
        %v661 = vunpack.c.l.bf16 %v625
        %v662 = vunpack.c.h.bf16 %v625
        %v663 = vunpack.c.l.bf16 %v626
        %v664 = vunpack.c.h.bf16 %v626
        %v665 = vunpack.c.l.bf16 %v627
        %v666 = vunpack.c.h.bf16 %v627
        %v667 = vunpack.c.l.bf16 %v628
        %v668 = vunpack.c.h.bf16 %v628
        %v669 = vunpack.c.l.bf16 %v629
        %v670 = vunpack.c.h.bf16 %v629
        %v671 = vunpack.c.l.bf16 %v630
        %v672 = vunpack.c.h.bf16 %v630
        %v673 = vunpack.c.l.bf16 %v631
        %v674 = vunpack.c.h.bf16 %v631
        %v675 = vunpack.c.l.bf16 %v632
        %v676 = vunpack.c.h.bf16 %v632
        %v677 = vunpack.c.l.bf16 %v633
        %v678 = vunpack.c.h.bf16 %v633
        %v679 = vunpack.c.l.bf16 %v634
        %v680 = vunpack.c.h.bf16 %v634
        %v681 = vunpack.c.l.bf16 %v635
        %v682 = vunpack.c.h.bf16 %v635
        %v683 = vunpack.c.l.bf16 %v636
        %v684 = vunpack.c.h.bf16 %v636
        %v685 = vunpack.c.l.bf16 %v637
        %v686 = vunpack.c.h.bf16 %v637
        %v687 = vunpack.c.l.bf16 %v638
        %v688 = vunpack.c.h.bf16 %v638
        %v689 = vunpack.c.l.bf16 %v639
        %v690 = vunpack.c.h.bf16 %v639
        %v691 = vunpack.c.l.bf16 %v640
        %v692 = vunpack.c.h.bf16 %v640
        %v693 = vunpack.c.l.bf16 %v641
        %v694 = vunpack.c.h.bf16 %v641
        %v695 = vunpack.c.l.bf16 %v642
        %v696 = vunpack.c.h.bf16 %v642
        %v697 = vunpack.c.l.bf16 %v643
        %v698 = vunpack.c.h.bf16 %v643
        %v699 = vunpack.c.l.bf16 %v644
        %v700 = vunpack.c.h.bf16 %v644
        %v701 = vunpack.c.l.bf16 %v645
        %v702 = vunpack.c.h.bf16 %v645
        %v703 = vunpack.c.l.bf16 %v646
        %v704 = vunpack.c.h.bf16 %v646
        %v705 = vunpack.c.l.bf16 %v647
        %v706 = vunpack.c.h.bf16 %v647
        %v707 = vunpack.c.l.bf16 %v648
        %v708 = vunpack.c.h.bf16 %v648
        %v709 = vunpack.c.l.bf16 %v649
        %v710 = vunpack.c.h.bf16 %v649
        %v711 = vunpack.c.l.bf16 %v650
        %v712 = vunpack.c.h.bf16 %v650
        %v713 = vunpack.c.l.bf16 %v651
        %v714 = vunpack.c.h.bf16 %v651
        %v715 = vunpack.c.l.bf16 %v652
        %v716 = vunpack.c.h.bf16 %v652
        %v717 = vadd.f32 %v463, %v653
        %v718 = vadd.f32 %v465, %v654
        %v719 = vadd.f32 %v467, %v655
        %v720 = vadd.f32 %v469, %v656
        %v721 = vadd.f32 %v473, %v657
        %v722 = vadd.f32 %v475, %v658
        %v723 = vadd.f32 %v477, %v659
        %v724 = vadd.f32 %v479, %v660
        %v725 = vadd.f32 %v483, %v661
        %v726 = vadd.f32 %v485, %v662
        %v727 = vadd.f32 %v487, %v663
        %v728 = vadd.f32 %v489, %v664
        %v729 = vadd.f32 %v493, %v665
        %v730 = vadd.f32 %v495, %v666
        %v731 = vadd.f32 %v497, %v667
        %v732 = vadd.f32 %v499, %v668
        %v733 = vadd.f32 %v503, %v669
        %v734 = vadd.f32 %v505, %v670
        %v735 = vadd.f32 %v507, %v671
        %v736 = vadd.f32 %v509, %v672
        %v737 = vadd.f32 %v513, %v673
        %v738 = vadd.f32 %v515, %v674
        %v739 = vadd.f32 %v517, %v675
        %v740 = vadd.f32 %v519, %v676
        %v741 = vadd.f32 %v523, %v677
        %v742 = vadd.f32 %v525, %v678
        %v743 = vadd.f32 %v527, %v679
        %v744 = vadd.f32 %v529, %v680
        %v745 = vadd.f32 %v533, %v681
        %v746 = vadd.f32 %v535, %v682
        %v747 = vadd.f32 %v537, %v683
        %v748 = vadd.f32 %v539, %v684
        %v749 = vadd.f32 %v543, %v685
        %v750 = vadd.f32 %v545, %v686
        %v751 = vadd.f32 %v547, %v687
        %v752 = vadd.f32 %v549, %v688
        %v753 = vadd.f32 %v553, %v689
        %v754 = vadd.f32 %v555, %v690
        %v755 = vadd.f32 %v557, %v691
        %v756 = vadd.f32 %v559, %v692
        %v757 = vadd.f32 %v563, %v693
        %v758 = vadd.f32 %v565, %v694
        %v759 = vadd.f32 %v567, %v695
        %v760 = vadd.f32 %v569, %v696
        %v761 = vadd.f32 %v573, %v697
        %v762 = vadd.f32 %v575, %v698
        %v763 = vadd.f32 %v577, %v699
        %v764 = vadd.f32 %v579, %v700
        %v765 = vadd.f32 %v583, %v701
        %v766 = vadd.f32 %v585, %v702
        %v767 = vadd.f32 %v587, %v703
        %v768 = vadd.f32 %v589, %v704
        %v769 = vadd.f32 %v593, %v705
        %v770 = vadd.f32 %v595, %v706
        %v771 = vadd.f32 %v597, %v707
        %v772 = vadd.f32 %v599, %v708
        %v773 = vadd.f32 %v603, %v709
        %v774 = vadd.f32 %v605, %v710
        %v775 = vadd.f32 %v607, %v711
        %v776 = vadd.f32 %v609, %v712
        %v777 = vadd.f32 %v613, %v713
        %v778 = vadd.f32 %v615, %v714
        %v779 = vadd.f32 %v617, %v715
        %v780 = vadd.f32 %v619, %v716
        %v781 = vpack.c.bf16 %v719, %v717
        %v782 = vpack.c.bf16 %v720, %v718
        %v783 = vpack.c.bf16 %v723, %v721
        %v784 = vpack.c.bf16 %v724, %v722
        %v785 = vpack.c.bf16 %v727, %v725
        %v786 = vpack.c.bf16 %v728, %v726
        %v787 = vpack.c.bf16 %v731, %v729
        %v788 = vpack.c.bf16 %v732, %v730
        %v789 = vpack.c.bf16 %v735, %v733
        %v790 = vpack.c.bf16 %v736, %v734
        %v791 = vpack.c.bf16 %v739, %v737
        %v792 = vpack.c.bf16 %v740, %v738
        %v793 = vpack.c.bf16 %v743, %v741
        %v794 = vpack.c.bf16 %v744, %v742
        %v795 = vpack.c.bf16 %v747, %v745
        %v796 = vpack.c.bf16 %v748, %v746
        %v797 = vpack.c.bf16 %v751, %v749
        %v798 = vpack.c.bf16 %v752, %v750
        %v799 = vpack.c.bf16 %v755, %v753
        %v800 = vpack.c.bf16 %v756, %v754
        %v801 = vpack.c.bf16 %v759, %v757
        %v802 = vpack.c.bf16 %v760, %v758
        %v803 = vpack.c.bf16 %v763, %v761
        %v804 = vpack.c.bf16 %v764, %v762
        %v805 = vpack.c.bf16 %v767, %v765
        %v806 = vpack.c.bf16 %v768, %v766
        %v807 = vpack.c.bf16 %v771, %v769
        %v808 = vpack.c.bf16 %v772, %v770
        %v809 = vpack.c.bf16 %v775, %v773
        %v810 = vpack.c.bf16 %v776, %v774
        %v811 = vpack.c.bf16 %v779, %v777
        %v812 = vpack.c.bf16 %v780, %v778
        %v845 = vunpack.c.l.b16 %v781
        %v846 = vunpack.c.l.b16 %v782
        %v847 = vunpack.c.h.b16 %v781
        %v848 = vunpack.c.h.b16 %v782
        %v849 = vunpack.c.l.b16 %v783
        %v850 = vunpack.c.l.b16 %v784
        %v851 = vunpack.c.h.b16 %v783
        %v852 = vunpack.c.h.b16 %v784
        %v853 = vunpack.c.l.b16 %v785
        %v854 = vunpack.c.l.b16 %v786
        %v855 = vunpack.c.h.b16 %v785
        %v856 = vunpack.c.h.b16 %v786
        %v857 = vunpack.c.l.b16 %v787
        %v858 = vunpack.c.l.b16 %v788
        %v859 = vunpack.c.h.b16 %v787
        %v860 = vunpack.c.h.b16 %v788
        %v861 = vunpack.c.l.b16 %v789
        %v862 = vunpack.c.l.b16 %v790
        %v863 = vunpack.c.h.b16 %v789
        %v864 = vunpack.c.h.b16 %v790
        %v865 = vunpack.c.l.b16 %v791
        %v866 = vunpack.c.l.b16 %v792
        %v867 = vunpack.c.h.b16 %v791
        %v868 = vunpack.c.h.b16 %v792
        %v869 = vunpack.c.l.b16 %v793
        %v870 = vunpack.c.l.b16 %v794
        %v871 = vunpack.c.h.b16 %v793
        %v872 = vunpack.c.h.b16 %v794
        %v873 = vunpack.c.l.b16 %v795
        %v874 = vunpack.c.l.b16 %v796
        %v875 = vunpack.c.h.b16 %v795
        %v876 = vunpack.c.h.b16 %v796
        %v877 = vunpack.c.l.b16 %v797
        %v878 = vunpack.c.l.b16 %v798
        %v879 = vunpack.c.h.b16 %v797
        %v880 = vunpack.c.h.b16 %v798
        %v881 = vunpack.c.l.b16 %v799
        %v882 = vunpack.c.l.b16 %v800
        %v883 = vunpack.c.h.b16 %v799
        %v884 = vunpack.c.h.b16 %v800
        %v885 = vunpack.c.l.b16 %v801
        %v886 = vunpack.c.l.b16 %v802
        %v887 = vunpack.c.h.b16 %v801
        %v888 = vunpack.c.h.b16 %v802
        %v889 = vunpack.c.l.b16 %v803
        %v890 = vunpack.c.l.b16 %v804
        %v891 = vunpack.c.h.b16 %v803
        %v892 = vunpack.c.h.b16 %v804
        %v893 = vunpack.c.l.b16 %v805
        %v894 = vunpack.c.l.b16 %v806
        %v895 = vunpack.c.h.b16 %v805
        %v896 = vunpack.c.h.b16 %v806
        %v897 = vunpack.c.l.b16 %v807
        %v898 = vunpack.c.l.b16 %v808
        %v899 = vunpack.c.h.b16 %v807
        %v900 = vunpack.c.h.b16 %v808
        %v901 = vunpack.c.l.b16 %v809
        %v902 = vunpack.c.l.b16 %v810
        %v903 = vunpack.c.h.b16 %v809
        %v904 = vunpack.c.h.b16 %v810
        %v905 = vunpack.c.l.b16 %v811
        %v906 = vunpack.c.l.b16 %v812
        %v907 = vunpack.c.h.b16 %v811
        %v908 = vunpack.c.h.b16 %v812
        %v909 = vpack.c.b16 %v846, %v845
        %v910 = vpack.c.b16 %v848, %v847
        %v911 = vpack.c.b16 %v850, %v849
        %v912 = vpack.c.b16 %v852, %v851
        %v913 = vpack.c.b16 %v854, %v853
        %v914 = vpack.c.b16 %v856, %v855
        %v915 = vpack.c.b16 %v858, %v857
        %v916 = vpack.c.b16 %v860, %v859
        %v917 = vpack.c.b16 %v862, %v861
        %v918 = vpack.c.b16 %v864, %v863
        %v919 = vpack.c.b16 %v866, %v865
        %v920 = vpack.c.b16 %v868, %v867
        %v921 = vpack.c.b16 %v870, %v869
        %v922 = vpack.c.b16 %v872, %v871
        %v923 = vpack.c.b16 %v874, %v873
        %v924 = vpack.c.b16 %v876, %v875
        %v925 = vpack.c.b16 %v878, %v877
        %v926 = vpack.c.b16 %v880, %v879
        %v927 = vpack.c.b16 %v882, %v881
        %v928 = vpack.c.b16 %v884, %v883
        %v929 = vpack.c.b16 %v886, %v885
        %v930 = vpack.c.b16 %v888, %v887
        %v931 = vpack.c.b16 %v890, %v889
        %v932 = vpack.c.b16 %v892, %v891
        %v933 = vpack.c.b16 %v894, %v893
        %v934 = vpack.c.b16 %v896, %v895
        %v935 = vpack.c.b16 %v898, %v897
        %v936 = vpack.c.b16 %v900, %v899
        %v937 = vpack.c.b16 %v902, %v901
        %v938 = vpack.c.b16 %v904, %v903
        %v939 = vpack.c.b16 %v906, %v905
        %v940 = vpack.c.b16 %v908, %v907
        %973 = vst [vmem:[%s232] sm:$0xff] %v909
        %974 = vst [vmem:[%s232 + $0x8] sm:$0xff] %v910
        %975 = vst [vmem:[%s232 + $0x10] sm:$0xff] %v911
        %976 = vst [vmem:[%s232 + $0x18] sm:$0xff] %v912
        %977 = vst [vmem:[%s232 + $0x20] sm:$0xff] %v913
        %978 = vst [vmem:[%s232 + $0x28] sm:$0xff] %v914
        %979 = vst [vmem:[%s232 + $0x30] sm:$0xff] %v915
        %980 = vst [vmem:[%s232 + $0x38] sm:$0xff] %v916
        %981 = vst [vmem:[%s232 + $0x40] sm:$0xff] %v917
        %982 = vst [vmem:[%s232 + $0x48] sm:$0xff] %v918
        %983 = vst [vmem:[%s232 + $0x50] sm:$0xff] %v919
        %984 = vst [vmem:[%s232 + $0x58] sm:$0xff] %v920
        %985 = vst [vmem:[%s232 + $0x60] sm:$0xff] %v921
        %986 = vst [vmem:[%s232 + $0x68] sm:$0xff] %v922
        %987 = vst [vmem:[%s232 + $0x70] sm:$0xff] %v923
        %988 = vst [vmem:[%s232 + $0x78] sm:$0xff] %v924
        %989 = vst [vmem:[%s232 + $0x80] sm:$0xff] %v925
        %990 = vst [vmem:[%s232 + $0x88] sm:$0xff] %v926
        %991 = vst [vmem:[%s232 + $0x90] sm:$0xff] %v927
        %992 = vst [vmem:[%s232 + $0x98] sm:$0xff] %v928
        %993 = vst [vmem:[%s232 + $0xa0] sm:$0xff] %v929
        %994 = vst [vmem:[%s232 + $0xa8] sm:$0xff] %v930
        %995 = vst [vmem:[%s232 + $0xb0] sm:$0xff] %v931
        %996 = vst [vmem:[%s232 + $0xb8] sm:$0xff] %v932
        %997 = vst [vmem:[%s232 + $0xc0] sm:$0xff] %v933
        %998 = vst [vmem:[%s232 + $0xc8] sm:$0xff] %v934
        %999 = vst [vmem:[%s232 + $0xd0] sm:$0xff] %v935
        %1000 = vst [vmem:[%s232 + $0xd8] sm:$0xff] %v936
        %1001 = vst [vmem:[%s232 + $0xe0] sm:$0xff] %v937
        %1002 = vst [vmem:[%s232 + $0xe8] sm:$0xff] %v938
        %1003 = vst [vmem:[%s232 + $0xf0] sm:$0xff] %v939
        %1004 = vst [vmem:[%s232 + $0xf8] sm:$0xff] %v940
        %s1005 = sand.u32 %s123, 1
        %s1006 = scalar_lea.sflag [#allocation4], %s1005
        %s1007 = sand.u32 %s123, 1
        %s1008 = smul.addr %s1007, 256
        %s1009 = scalar_lea.vmem [#allocation5], %s1008
        // Predicated region
        $region41: #{tpu_custom_call.1} parent=35 // pred_check
          %p1010 = pneg %p133
        $region42: #{tpu_custom_call.1} parent=35 // pred_check_branch
          %1012 = sbr.rel (%p1010) target = $region44
        $region43: #{tpu_custom_call.1} parent=35 // pred_region
          %s1013 = smul.u32 32, %s21
          %s1015 = ssub.s32 4096, 4096
          %1016 = vsyncadd %s1006, %s1015
          %s1017 = smul.addr %s1013, 2
          %s1018 = smul.addr %s1017, 64
          %s1019 = scalar_lea.hbm %s4, %s1018
          %s1020 = sshll.u32 %s1009, 4
          %s1021 = int_to_ptr.vmem [resolvable:$true] %s1020
          %1026 = dma.vmem_to_hbm [thread:$0]  %s1021, 4096, %s1019, %s1006, 128, 128, 8
        $region44: #{tpu_custom_call.1} parent=35 // pred_fallthru
          _
      $region36: #{tpu_custom_call.1} parent=5 // pred_fallthru
        _
      %p1027 = scmp.le.s32.totalorder 2, %s16
      // Predicated region
      $region45: #{tpu_custom_call.1} parent=5 // pred_check
        %p1028 = pneg %p1027
      $region46: #{tpu_custom_call.1} parent=5 // pred_check_branch
        %1030 = sbr.rel (%p1028) target = $region48
      $region47: #{tpu_custom_call.1} parent=5 // pred_region
        %s1031 = ssub.s32 %s16, 2
        // Predicated region
        $region49: #{tpu_custom_call.1} parent=47 // pred_check
          %p1032 = pneg %p139
        $region50: #{tpu_custom_call.1} parent=47 // pred_check_branch
          %1034 = sbr.rel (%p1032) target = $region52
        $region51: #{tpu_custom_call.1} parent=47 // pred_region
          %s1035 = sand.u32 %s124, 1
          %s1036 = scalar_lea.sflag [#allocation4], %s1035
          %s1037 = sand.u32 %s124, 1
          %s1038 = smul.addr %s1037, 256
          %s1039 = scalar_lea.vmem [#allocation5], %s1038
          %1040 = dma.done %s1036, 4096
        $region52: #{tpu_custom_call.1} parent=47 // pred_fallthru
          _
      $region48: #{tpu_custom_call.1} parent=5 // pred_fallthru
        _
    $region6: #{tpu_custom_call.1} parent=1 // loop_footer
      %s20 = sadd.s32 1, %s16
    $region7: #{tpu_custom_call.1} parent=1 // loop_footer_branch
      %15 = sbr.rel target = $region3
    $region8: #{tpu_custom_call.1} parent=1 // loop_exit
      _
    %1041 = vsyncpa [#allocation3], 1
    %s1042 = scalar_lea.sflag [#allocation3], 1
    %1043 = vsyncpa %s1042, 1
    %1044 = vsyncpa [#allocation4], 1
    %s1045 = scalar_lea.sflag [#allocation4], 1
    %1046 = vsyncpa %s1045, 1

</llo_original>
